<compile_context>
chip_gen: v5e
topology: v5e:2x2
jax: 0.10.0
libtpu: 0.0.40
codegen_flags: <defaults>
</compile_context>

<pallas_src>
import functools

import jax
import jax.numpy as jnp
from jax.experimental import pallas as pl
from jax.experimental.pallas import tpu as pltpu


def _round_up(x, m):
    return ((x + m - 1) // m) * m


# -----------------------------------------------------------------------------
# Pallas kernel: single-dot fused conv + BN-bias + ReLU
# -----------------------------------------------------------------------------
def _make_kernel(nb, cin, kh, kw, ho, wp, stride, cout_s):
    """Build the fused kernel for static shapes.

    Refs per grid step (one batch tile of nb images):
      x_ref:    (nb, Cin, F)          bf16  zero-padded NCHW image, (Hp,Wp) flattened + tail pad
      w_ref:    (Cout_s, K)           bf16  BN-scale-folded weight, K = kh*kw*Cin
      bias_ref: (Cout_s, 1)           f32   folded BN bias
      o_ref:    (nb, Cout_s, Ho*Wp)   f32   NCHW-flat output (lane dim = Ho*Wp; the
                                            Wp-Wo garbage columns are sliced off outside)
    """
    m = ho * wp  # matmul columns per image

    def kernel(x_ref, w_ref, bias_ref, o_ref):
        xv = x_ref[...]                                     # (nb, Cin, F) bf16, tiny
        cols = []
        for n in range(nb):
            taps = []
            for i in range(kh):
                for j in range(kw):
                    off = i * wp + j
                    # Shifted (strided for stride>1) lane slice: no reshape/relayout.
                    taps.append(xv[n, :, off:off + stride * m:stride])   # (Cin, m)
            cols.append(jnp.concatenate(taps, axis=0))       # (K, m)
        xmat = cols[0] if nb == 1 else jnp.concatenate(cols, axis=1)     # (K, nb*m)

        # Single MXU dot, f32 accumulation; result already in (Cout, spatial) layout.
        acc = jnp.dot(w_ref[...], xmat, preferred_element_type=jnp.float32)
        y = jnp.maximum(acc + bias_ref[...], 0.0)            # (Cout_s, nb*m) f32
        for n in range(nb):
            o_ref[n] = y[:, n * m:(n + 1) * m].astype(o_ref.dtype)

    return kernel


def _fused_conv_bn_relu(xflat, w_mat, bias, nb, cin, kh, kw, ho, wp, stride, cout_s):
    """xflat: (N_pad, Cin, F) bf16; returns (N_pad, Cout_s, Ho*Wp) f32."""
    n_pad, _, f = xflat.shape
    k = w_mat.shape[1]
    m = ho * wp
    kernel = _make_kernel(nb, cin, kh, kw, ho, wp, stride, cout_s)
    return pl.pallas_call(
        kernel,
        out_shape=jax.ShapeDtypeStruct((n_pad, cout_s, m), jnp.float32),
        grid_spec=pltpu.PrefetchScalarGridSpec(
            num_scalar_prefetch=0,
            grid=(n_pad // nb,),                              # >= 2 steps -> both v7x TCs
            in_specs=[
                pl.BlockSpec((nb, cin, f), lambda b: (b, 0, 0)),
                pl.BlockSpec((cout_s, k), lambda b: (0, 0)),
                pl.BlockSpec((cout_s, 1), lambda b: (0, 0)),
            ],
            out_specs=pl.BlockSpec((nb, cout_s, m), lambda b: (b, 0, 0)),
        ),
        compiler_params=pltpu.CompilerParams(
            dimension_semantics=("parallel",),
            vmem_limit_bytes=32 * 1024 * 1024,
        ),
    )(xflat, w_mat, bias)


# -----------------------------------------------------------------------------
# BasicConv2d module equivalent
# -----------------------------------------------------------------------------
def init_basic_conv2d_params(key, in_channels, out_channels, kernel_size):
    kh = kw = kernel_size
    k_w, k_g, k_b, k_m, k_v = jax.random.split(key, 5)
    fan_in = in_channels * kh * kw
    w = jax.random.normal(k_w, (out_channels, in_channels, kh, kw), jnp.float32)
    w = w * (2.0 / fan_in) ** 0.5
    gamma = 1.0 + 0.1 * jax.random.normal(k_g, (out_channels,), jnp.float32)
    beta = 0.1 * jax.random.normal(k_b, (out_channels,), jnp.float32)
    running_mean = 0.1 * jax.random.normal(k_m, (out_channels,), jnp.float32)
    running_var = jnp.abs(jax.random.normal(k_v, (out_channels,), jnp.float32)) + 0.5
    return dict(weight=w, gamma=gamma, beta=beta,
                running_mean=running_mean, running_var=running_var)


@functools.partial(jax.jit, static_argnames=("kernel_size", "stride", "padding"))
def basic_conv2d_forward(params, x, *, kernel_size=3, stride=1, padding=1, eps=0.001):
    """x: (N, C_in, H, W) f32 -> (N, C_out, Ho, Wo) f32 (PyTorch NCHW semantics)."""
    w = params["weight"]                       # (Cout, Cin, KH, KW)
    cout, cin, kh, kw = w.shape
    N, _, H, W = x.shape
    hp, wp = H + 2 * padding, W + 2 * padding
    ho = (hp - kh) // stride + 1
    wo = (wp - kw) // stride + 1
    K = kh * kw * cin
    cout_s = _round_up(cout, 8)                # sublane-aligned only; no 128-wide Cout pad
    # TODO(synk): for large Cout (Inception 192/384) add a Cout grid axis (tile 256 on
    # v6e/v7x, 128 on v5e) instead of computing all channels in one step.

    # Eval-mode BN folded into weight/bias so the kernel is dot + bias + relu only.
    scale = params["gamma"] / jnp.sqrt(params["running_var"] + eps)
    bias = params["beta"] - params["running_mean"] * scale

    # W_mat[co, (i*kw + j)*Cin + c] = w[co, c, i, j] * scale[co]
    w_mat = w.transpose(0, 2, 3, 1).reshape(cout, K) * scale[:, None]
    w_mat = jnp.pad(w_mat, ((0, cout_s - cout), (0, 0))).astype(jnp.bfloat16)
    bias_p = jnp.pad(bias, (0, cout_s - cout)).reshape(cout_s, 1).astype(jnp.float32)

    # Input stays NCHW: zero-pad spatially, flatten (Hp, Wp) -> one lane axis, tail-pad
    # so every shifted tap slice of length Ho*Wp stays in bounds, cast to bf16 once.
    xp = jnp.pad(x, ((0, 0), (0, 0), (padding, padding), (padding, padding)))
    m = ho * wp
    needed = (kh - 1) * wp + (kw - 1) + stride * (m - 1) + 1
    tail = max(0, needed - hp * wp)
    xflat = jnp.pad(xp.reshape(N, cin, hp * wp), ((0, 0), (0, 0), (0, tail)))
    xflat = xflat.astype(jnp.bfloat16)

    # Batch tiling: amortize per-step overhead, keep >= 2 grid steps for v7x megacore,
    # and keep the in-register patch matrix modest (~<=1024 lanes).
    nb = max(1, min(N, 1024 // m))
    if N >= 2:
        nb = max(1, min(nb, N // 2))
    n_pad = _round_up(N, nb)
    if n_pad > N:
        xflat = jnp.pad(xflat, ((0, n_pad - N), (0, 0), (0, 0)))

    y = _fused_conv_bn_relu(xflat, w_mat, bias_p, nb, cin, kh, kw, ho, wp, stride, cout_s)
    # (N_pad, Cout_s, Ho*Wp) is already NCHW-flat; drop batch/channel padding and the
    # Wp-Wo per-row garbage columns.
    y = y.reshape(n_pad, cout_s, ho, wp)[:N, :cout, :, :wo]
    return y


# -----------------------------------------------------------------------------
# Reference (pure JAX, f32) for sanity checking
# -----------------------------------------------------------------------------
def _reference(params, x, *, stride=1, padding=1, eps=0.001):
    w = params["weight"]
    y = jax.lax.conv_general_dilated(
        x, w, window_strides=(stride, stride),
        padding=[(padding, padding), (padding, padding)],
        dimension_numbers=("NCHW", "OIHW", "NCHW"),
    )
    scale = params["gamma"] / jnp.sqrt(params["running_var"] + eps)
    bias = params["beta"] - params["running_mean"] * scale
    y = y * scale[None, :, None, None] + bias[None, :, None, None]
    return jnp.maximum(y, 0.0)


if __name__ == "__main__":
    key = jax.random.PRNGKey(0)
    k_param, k_x = jax.random.split(key)

    N, C_in, C_out, H, W = 2, 4, 8, 16, 16
    kernel_size, stride, padding = 3, 1, 1

    params = init_basic_conv2d_params(k_param, C_in, C_out, kernel_size)
    x = jax.random.normal(k_x, (N, C_in, H, W), jnp.float32)

    out = basic_conv2d_forward(
        params, x, kernel_size=kernel_size, stride=stride, padding=padding
    )
    out = jax.block_until_ready(out)

    ref = jax.block_until_ready(_reference(params, x, stride=stride, padding=padding))
    assert out.shape == (N, C_out, H, W), out.shape
    # MXU inputs are bfloat16 (f32 accumulation), so tolerance is loosened vs f32 ref.
    err = float(jnp.abs(out - ref).max())
    assert jnp.allclose(out, ref, atol=5e-2, rtol=5e-2), err

    # TODO(synk): training-mode BatchNorm (batch statistics + running-stat updates) not
    # implemented; eval-mode (running-stats) affine is folded into the weight/bias.
    print("KERNEL_OK")
</pallas_src>

<mosaic_0001>
module attributes {stable_mosaic.version = 11 : i64} {
  func.func @kernel(%arg0: i32, %arg1: memref<1x4x326xbf16, #tpu.memory_space<vmem>>, %arg2: memref<8x36xbf16, #tpu.memory_space<vmem>>, %arg3: memref<8x1xf32, #tpu.memory_space<vmem>>, %arg4: memref<1x8x288xf32, #tpu.memory_space<vmem>>) attributes {dimension_semantics = [#tpu.dimension_semantics<parallel>], iteration_bounds = array<i64: 2>, scalar_prefetch = 0 : i64, scratch_operands = 0 : i64, tpu.core_type = #tpu.core_type<tc>, window_params = [{transform_indices = @transform_0, window_bounds = array<i64: 1, 4, 326>}, {pipeline_mode = #tpu.pipeline_mode<synchronous>, transform_indices = @transform_1, window_bounds = array<i64: 8, 36>}, {pipeline_mode = #tpu.pipeline_mode<synchronous>, transform_indices = @transform_2, window_bounds = array<i64: 8, 1>}, {transform_indices = @transform_3, window_bounds = array<i64: 1, 8, 288>}]} {
    %c0 = arith.constant 0 : index
    %c0_0 = arith.constant 0 : index
    %c0_1 = arith.constant 0 : index
    %0 = vector.load %arg1[%c0, %c0_0, %c0_1] : memref<1x4x326xbf16, #tpu.memory_space<vmem>>, vector<1x4x326xbf16>
    %1 = vector.extract_strided_slice %0 {offsets = [0, 0, 0], sizes = [1, 4, 288], strides = [1, 1, 1]} : vector<1x4x326xbf16> to vector<1x4x288xbf16>
    %2 = vector.shape_cast %1 : vector<1x4x288xbf16> to vector<4x288xbf16>
    %3 = vector.extract_strided_slice %0 {offsets = [0, 0, 1], sizes = [1, 4, 288], strides = [1, 1, 1]} : vector<1x4x326xbf16> to vector<1x4x288xbf16>
    %4 = vector.shape_cast %3 : vector<1x4x288xbf16> to vector<4x288xbf16>
    %5 = vector.extract_strided_slice %0 {offsets = [0, 0, 2], sizes = [1, 4, 288], strides = [1, 1, 1]} : vector<1x4x326xbf16> to vector<1x4x288xbf16>
    %6 = vector.shape_cast %5 : vector<1x4x288xbf16> to vector<4x288xbf16>
    %7 = vector.extract_strided_slice %0 {offsets = [0, 0, 18], sizes = [1, 4, 288], strides = [1, 1, 1]} : vector<1x4x326xbf16> to vector<1x4x288xbf16>
    %8 = vector.shape_cast %7 : vector<1x4x288xbf16> to vector<4x288xbf16>
    %9 = vector.extract_strided_slice %0 {offsets = [0, 0, 19], sizes = [1, 4, 288], strides = [1, 1, 1]} : vector<1x4x326xbf16> to vector<1x4x288xbf16>
    %10 = vector.shape_cast %9 : vector<1x4x288xbf16> to vector<4x288xbf16>
    %11 = vector.extract_strided_slice %0 {offsets = [0, 0, 20], sizes = [1, 4, 288], strides = [1, 1, 1]} : vector<1x4x326xbf16> to vector<1x4x288xbf16>
    %12 = vector.shape_cast %11 : vector<1x4x288xbf16> to vector<4x288xbf16>
    %13 = vector.extract_strided_slice %0 {offsets = [0, 0, 36], sizes = [1, 4, 288], strides = [1, 1, 1]} : vector<1x4x326xbf16> to vector<1x4x288xbf16>
    %14 = vector.shape_cast %13 : vector<1x4x288xbf16> to vector<4x288xbf16>
    %15 = vector.extract_strided_slice %0 {offsets = [0, 0, 37], sizes = [1, 4, 288], strides = [1, 1, 1]} : vector<1x4x326xbf16> to vector<1x4x288xbf16>
    %16 = vector.shape_cast %15 : vector<1x4x288xbf16> to vector<4x288xbf16>
    %17 = vector.extract_strided_slice %0 {offsets = [0, 0, 38], sizes = [1, 4, 288], strides = [1, 1, 1]} : vector<1x4x326xbf16> to vector<1x4x288xbf16>
    %18 = vector.shape_cast %17 : vector<1x4x288xbf16> to vector<4x288xbf16>
    %19 = tpu.concatenate %2, %4, %6, %8, %10, %12, %14, %16, %18 in 0 : vector<4x288xbf16>, vector<4x288xbf16>, vector<4x288xbf16>, vector<4x288xbf16>, vector<4x288xbf16>, vector<4x288xbf16>, vector<4x288xbf16>, vector<4x288xbf16>, vector<4x288xbf16> -> vector<36x288xbf16>
    %c0_2 = arith.constant 0 : index
    %c0_3 = arith.constant 0 : index
    %20 = vector.load %arg2[%c0_2, %c0_3] : memref<8x36xbf16, #tpu.memory_space<vmem>>, vector<8x36xbf16>
    %cst = arith.constant dense<0.000000e+00> : vector<8x288xf32>
    %21 = tpu.matmul %20, %19, %cst {dimension_numbers = #tpu.dot_dimension_numbers<[1], [0], [0], [1], [0, 0, 1, 1], [], []>} : vector<8x36xbf16>, vector<36x288xbf16>, vector<8x288xf32> -> vector<8x288xf32>
    %c0_4 = arith.constant 0 : index
    %c0_5 = arith.constant 0 : index
    %22 = vector.load %arg3[%c0_4, %c0_5] : memref<8x1xf32, #tpu.memory_space<vmem>>, vector<8x1xf32>
    %23 = vector.broadcast %22 : vector<8x1xf32> to vector<8x288xf32>
    %24 = arith.addf %21, %23 : vector<8x288xf32>
    %cst_6 = arith.constant 0.000000e+00 : f32
    %25 = vector.broadcast %cst_6 : f32 to vector<8x288xf32>
    %26 = arith.maximumf %24, %25 : vector<8x288xf32>
    %c0_7 = arith.constant 0 : index
    %c0_8 = arith.constant 0 : index
    %c0_9 = arith.constant 0 : index
    %27 = vector.load %arg4[%c0_7, %c0_8, %c0_9] : memref<1x8x288xf32, #tpu.memory_space<vmem>>, vector<1x8x288xf32>
    %28 = vector.shape_cast %27 : vector<1x8x288xf32> to vector<8x288xf32>
    %29 = vector.shape_cast %26 : vector<8x288xf32> to vector<1x8x288xf32>
    tpu.vector_store %arg4[%c0_7, %c0_8, %c0_9], %29 {strides = array<i32>} : memref<1x8x288xf32, #tpu.memory_space<vmem>>, vector<1x8x288xf32>,
    return
  }
  func.func @transform_0(%arg0: i32) -> (i32, i32, i32) {
    %c0_i32 = arith.constant 0 : i32
    %c0_i32_0 = arith.constant 0 : i32
    %c0_i32_1 = arith.constant 0 : i32
    return %arg0, %c0_i32, %c0_i32_0 : i32, i32, i32
  }
  func.func @transform_1(%arg0: i32) -> (i32, i32) {
    %c0_i32 = arith.constant 0 : i32
    %c0_i32_0 = arith.constant 0 : i32
    %c0_i32_1 = arith.constant 0 : i32
    return %c0_i32, %c0_i32_0 : i32, i32
  }
  func.func @transform_2(%arg0: i32) -> (i32, i32) {
    %c0_i32 = arith.constant 0 : i32
    %c0_i32_0 = arith.constant 0 : i32
    %c0_i32_1 = arith.constant 0 : i32
    return %c0_i32, %c0_i32_0 : i32, i32
  }
  func.func @transform_3(%arg0: i32) -> (i32, i32, i32) {
    %c0_i32 = arith.constant 0 : i32
    %c0_i32_0 = arith.constant 0 : i32
    %c0_i32_1 = arith.constant 0 : i32
    return %arg0, %c0_i32, %c0_i32_0 : i32, i32, i32
  }
}

</mosaic_0001>

<llo_original>
// kernel: basic_conv2d_forward.1
$region0: #{basic_conv2d_forward.1}
  #allocation0 [shape = 'u32[]', space=smem, size = 0x4, offset = 0x4, fixed_abs, tag = 'smem constant byte address 0x4 - core index']
  #allocation1 [shape = 'u32[72,128]{1,0:T(1,128)}', space=vmem, size = 0x9000, scoped, tag = 'internal scratch']
  %s0 = inlined_call_operand.vmem [shape: bf16[2,4,326], index: 0, kind: input, shape index: {}]
  %s1 = inlined_call_operand.vmem [shape: bf16[8,36], index: 1, kind: input, shape index: {}]
  %s2 = inlined_call_operand.vmem [shape: f32[8,1], index: 2, kind: input, shape index: {}]
  %s3 = inlined_call_operand.vmem [shape: f32[2,8,288], index: 3, kind: output, shape index: {}]
  %s4 = sld [smem:[#allocation0]]
  $region45: #{basic_conv2d_forward.1} parent=0
    _
  %s6 = ssub.s32 1, %s4
  %s7 = scalar_select 0, %s6, %s4
  loop: start=0, step=1, limit=4
  $region2: #{basic_conv2d_forward.1} parent=0 // loop_pre_header
    _
  $region3: #{basic_conv2d_forward.1} parent=0 // loop_header
    %s9 = sphi 0, %s13
    %p10 = scmp.ge.s32.totalorder %s9, 4
    %s19 = sphi 0, %s21
    %s22 = sphi 0, %s19
    %s23 = sphi 0, %s22
    %s39 = sphi 0, %s23
    %s43 = sphi 0, %s43
    %s45 = sphi 0, %s43
    %s46 = sphi 0, %s45
    %s60 = sphi 0, %s46
    %s64 = sphi 0, %s64
    %s66 = sphi 0, %s64
    %s67 = sphi 0, %s66
    %s81 = sphi 0, %s67
    %s87 = sphi 0, %s89
    %s90 = sphi 0, %s87
    %s91 = sphi 0, %s90
    %s107 = sphi 0, %s91
  $region4: #{basic_conv2d_forward.1} parent=0 // loop_header_branch
    %12 = sbr.rel (%p10) target = $region8
  $region5: #{basic_conv2d_forward.1} parent=0 // loop_body
    %s14 = ssub.s32 %s9, 1
    %s15 = ssub.s32 %s9, 2
    %s16 = sadd.s32 %s9, 1
    %s17 = ssub.s32 %s9, %s16
    %p18 = scmp.eq.s32.totalorder %s17, 0
    %s20 = sadd.s32 %s19, 1
    %s21 = scalar_select %p18, %s19, %s20
    %p24 = pneg %p18
    %p25 = scmp.eq.s32.totalorder %s9, 1
    %p26 = por %p24, %p25
    %p27 = scmp.ne.s32.totalorder %s19, %s22
    %p28 = scmp.eq.s32.totalorder %s9, 0
    %p29 = por %p27, %p28
    %p30 = scmp.ne.s32.totalorder %s19, %s22
    %p31 = scmp.eq.s32.totalorder %s14, 1
    %p32 = por %p30, %p31
    %p33 = scmp.ne.s32.totalorder %s22, %s23
    %p34 = scmp.eq.s32.totalorder %s14, 0
    %p35 = por %p33, %p34
    %p36 = scmp.ne.s32.totalorder %s22, %s23
    %p37 = scmp.eq.s32.totalorder %s15, 1
    %p38 = por %p36, %p37
    %p40 = scmp.ne.s32.totalorder %s23, %s39
    %p41 = scmp.eq.s32.totalorder %s15, 0
    %p42 = por %p40, %p41
    %s44 = sadd.s32 %s43, 1
    %p47 = scmp.eq.s32.totalorder %s9, 1
    %p48 = scmp.ne.s32.totalorder %s43, %s45
    %p49 = scmp.eq.s32.totalorder %s9, 0
    %p50 = por %p48, %p49
    %p51 = scmp.ne.s32.totalorder %s43, %s45
    %p52 = scmp.eq.s32.totalorder %s14, 1
    %p53 = por %p51, %p52
    %p54 = scmp.ne.s32.totalorder %s45, %s46
    %p55 = scmp.eq.s32.totalorder %s14, 0
    %p56 = por %p54, %p55
    %p57 = scmp.ne.s32.totalorder %s45, %s46
    %p58 = scmp.eq.s32.totalorder %s15, 1
    %p59 = por %p57, %p58
    %p61 = scmp.ne.s32.totalorder %s46, %s60
    %p62 = scmp.eq.s32.totalorder %s15, 0
    %p63 = por %p61, %p62
    %s65 = sadd.s32 %s64, 1
    %p68 = scmp.eq.s32.totalorder %s9, 1
    %p69 = scmp.ne.s32.totalorder %s64, %s66
    %p70 = scmp.eq.s32.totalorder %s9, 0
    %p71 = por %p69, %p70
    %p72 = scmp.ne.s32.totalorder %s64, %s66
    %p73 = scmp.eq.s32.totalorder %s14, 1
    %p74 = por %p72, %p73
    %p75 = scmp.ne.s32.totalorder %s66, %s67
    %p76 = scmp.eq.s32.totalorder %s14, 0
    %p77 = por %p75, %p76
    %p78 = scmp.ne.s32.totalorder %s66, %s67
    %p79 = scmp.eq.s32.totalorder %s15, 1
    %p80 = por %p78, %p79
    %p82 = scmp.ne.s32.totalorder %s67, %s81
    %p83 = scmp.eq.s32.totalorder %s15, 0
    %p84 = por %p82, %p83
    %s85 = ssub.s32 %s9, %s16
    %p86 = scmp.eq.s32.totalorder %s85, 0
    %s88 = sadd.s32 %s87, 1
    %s89 = scalar_select %p86, %s87, %s88
    %p92 = pneg %p86
    %p93 = scmp.eq.s32.totalorder %s9, 1
    %p94 = por %p92, %p93
    %p95 = scmp.ne.s32.totalorder %s87, %s90
    %p96 = scmp.eq.s32.totalorder %s9, 0
    %p97 = por %p95, %p96
    %p98 = scmp.ne.s32.totalorder %s87, %s90
    %p99 = scmp.eq.s32.totalorder %s14, 1
    %p100 = por %p98, %p99
    %p101 = scmp.ne.s32.totalorder %s90, %s91
    %p102 = scmp.eq.s32.totalorder %s14, 0
    %p103 = por %p101, %p102
    %p104 = scmp.ne.s32.totalorder %s90, %s91
    %p105 = scmp.eq.s32.totalorder %s15, 1
    %p106 = por %p104, %p105
    %p108 = scmp.ne.s32.totalorder %s91, %s107
    %p109 = scmp.eq.s32.totalorder %s15, 0
    %p110 = por %p108, %p109
    %p111 = scmp.le.s32.totalorder 1, %s9
    %p112 = scmp.lt.s32.totalorder %s9, 3
    %p113 = pnand %p111, %p112
    %p114 = pneg %p113
    // Predicated region
    $region9: #{basic_conv2d_forward.1} parent=5 // pred_check
      _
    $region10: #{basic_conv2d_forward.1} parent=5 // pred_check_branch
      %116 = sbr.rel (%p113) target = $region12
    $region11: #{basic_conv2d_forward.1} parent=5 // pred_region
      %s117 = ssub.s32 %s9, 1
      // Predicated region
      $region13: #{basic_conv2d_forward.1} parent=11 // pred_check
        %p118 = pneg %p56
      $region14: #{basic_conv2d_forward.1} parent=11 // pred_check_branch
        %120 = sbr.rel (%p118) target = $region16
      $region15: #{basic_conv2d_forward.1} parent=11 // pred_region
        _
      $region16: #{basic_conv2d_forward.1} parent=11 // pred_fallthru
        _
      // Predicated region
      $region17: #{basic_conv2d_forward.1} parent=11 // pred_check
        %p121 = pneg %p77
      $region18: #{basic_conv2d_forward.1} parent=11 // pred_check_branch
        %123 = sbr.rel (%p121) target = $region20
      $region19: #{basic_conv2d_forward.1} parent=11 // pred_region
        _
      $region20: #{basic_conv2d_forward.1} parent=11 // pred_fallthru
        _
    $region12: #{basic_conv2d_forward.1} parent=5 // pred_fallthru
      _
    %p124 = scmp.lt.s32.totalorder %s9, 2
    // Predicated region
    $region21: #{basic_conv2d_forward.1} parent=5 // pred_check
      %p125 = pneg %p124
    $region22: #{basic_conv2d_forward.1} parent=5 // pred_check_branch
      %127 = sbr.rel (%p125) target = $region24
    $region23: #{basic_conv2d_forward.1} parent=5 // pred_region
      // Predicated region
      $region25: #{basic_conv2d_forward.1} parent=23 // pred_check
        %p128 = pneg %p29
      $region26: #{basic_conv2d_forward.1} parent=23 // pred_check_branch
        %130 = sbr.rel (%p128) target = $region28
      $region27: #{basic_conv2d_forward.1} parent=23 // pred_region
        %p131 = scmp.lt.s32.totalorder %s9, 1
        %s132 = scalar_select %p131, %s9, 1
        %s133 = smul.addr %s132, 3
        %s134 = smul.addr %s133, 2
        %s135 = scalar_lea.vmem %s0, %s134
      $region28: #{basic_conv2d_forward.1} parent=23 // pred_fallthru
        _
    $region24: #{basic_conv2d_forward.1} parent=5 // pred_fallthru
      _
    %p136 = scmp.le.s32.totalorder 1, %s9
    %p137 = scmp.lt.s32.totalorder %s9, 3
    %p138 = pnand %p136, %p137
    %p139 = pneg %p138
    // Predicated region
    $region29: #{basic_conv2d_forward.1} parent=5 // pred_check
      _
    $region30: #{basic_conv2d_forward.1} parent=5 // pred_check_branch
      %141 = sbr.rel (%p138) target = $region32
    $region31: #{basic_conv2d_forward.1} parent=5 // pred_region
      %s142 = ssub.s32 %s9, 1
      %p143 = scmp.lt.s32.totalorder %s14, 1
      %s144 = scalar_select %p143, %s14, 1
      %s145 = smul.addr %s144, 3
      %s146 = smul.addr %s145, 2
      %s147 = scalar_lea.vmem %s0, %s146
      %p148 = pneg %p35
      %p149 = pneg %p32
      %p150 = pneg %p56
      %p151 = pneg %p53
      %p152 = pneg %p77
      %p153 = pneg %p74
      %p154 = pneg %p103
      %p155 = pneg %p100
      %p156 = scmp.lt.s32.totalorder %s14, 1
      %s157 = scalar_select %p156, %s14, 1
      %s158 = smul.addr %s157, 3
      %s159 = smul.addr %s158, 8
      %s160 = scalar_lea.vmem %s3, %s159
      %p161 = scmp.lt.s32.totalorder %s14, 1
      %s162 = scalar_select %p161, %s14, 1
      %s163 = smul.addr %s162, 3
      %s164 = smul.addr %s163, 2
      %s165 = scalar_lea.vmem %s0, %s164
      %p166 = scmp.lt.s32.totalorder %s14, 1
      %s167 = scalar_select %p166, %s14, 1
      %s168 = smul.addr %s167, 3
      %s169 = smul.addr %s168, 8
      %s170 = scalar_lea.vmem %s3, %s169
      %v172 = vld [vmem:[%s165] sm:$0x3f]
      %174 = vst [vmem:[#allocation1] ss:$4 sm:$0xff] %v172
      %v175 = vld.sshfl [vmem:[#allocation1] sm:$0xff pattern:$0x73625140]
      %v176 = vld.sshfl [vmem:[#allocation1 + $0x8] sm:$0xff pattern:$0x73625140]
      %v177 = vld.sshfl [vmem:[#allocation1 + $0x10] sm:$0xff pattern:$0x73625140]
      %s178 = scalar_lea.vmem [#allocation1], 1
      %179 = vst [vmem:[%s178] ss:$4 sm:$0xff] %v172
      %v180 = vld.sshfl [vmem:[#allocation1] sm:$0xff pattern:$0x73625140]
      %v182 = vld.sshfl [vmem:[#allocation1 + $0x8] sm:$0xff pattern:$0x73625140]
      %v184 = vld.sshfl [vmem:[#allocation1 + $0x10] sm:$0xff pattern:$0x73625140]
      %186 = vrot.lane.b32.xlu0 %v180, 127
      %v187 = vpop.permute.xlu0 %186
      %188 = vrot.lane.b32.xlu0 %v182, 127
      %v189 = vpop.permute.xlu0 %188
      %190 = vrot.lane.b32.xlu0 %v184, 127
      %v191 = vpop.permute.xlu0 %190
      %vm192 = vcmask 1039360
      %v193 = vsel %vm192, %v187, %v189
      %v194 = vsel %vm192, %v189, %v191
      %s195 = scalar_lea.vmem [#allocation1], 2
      %196 = vst [vmem:[%s195] ss:$4 sm:$0xff] %v172
      %v197 = vld.sshfl [vmem:[#allocation1] sm:$0xff pattern:$0x73625140]
      %v199 = vld.sshfl [vmem:[#allocation1 + $0x8] sm:$0xff pattern:$0x73625140]
      %v201 = vld.sshfl [vmem:[#allocation1 + $0x10] sm:$0xff pattern:$0x73625140]
      %203 = vrot.lane.b32.xlu0 %v197, 126
      %v204 = vpop.permute.xlu0 %203
      %205 = vrot.lane.b32.xlu0 %v199, 126
      %v206 = vpop.permute.xlu0 %205
      %207 = vrot.lane.b32.xlu0 %v201, 126
      %v208 = vpop.permute.xlu0 %207
      %vm209 = vcmask 1031168
      %v210 = vsel %vm209, %v204, %v206
      %v211 = vsel %vm209, %v206, %v208
      %s212 = scalar_lea.vmem [#allocation1], 3
      %213 = vst [vmem:[%s212] ss:$4 sm:$0xff] %v172
      %v214 = vld.sshfl [vmem:[#allocation1] sm:$0xff pattern:$0x73625140]
      %v216 = vld.sshfl [vmem:[#allocation1 + $0x8] sm:$0xff pattern:$0x73625140]
      %v218 = vld.sshfl [vmem:[#allocation1 + $0x10] sm:$0xff pattern:$0x73625140]
      %220 = vrot.lane.b32.xlu0 %v214, 110
      %v221 = vpop.permute.xlu0 %220
      %222 = vrot.lane.b32.xlu0 %v216, 110
      %v223 = vpop.permute.xlu0 %222
      %224 = vrot.lane.b32.xlu0 %v218, 110
      %v225 = vpop.permute.xlu0 %224
      %vm226 = vcmask 900096
      %v227 = vsel %vm226, %v221, %v223
      %v228 = vsel %vm226, %v223, %v225
      %229 = vst [vmem:[#allocation1] ss:$4 sm:$0xff] %v172
      %v230 = vld.sshfl [vmem:[#allocation1] sm:$0xff pattern:$0x73625140]
      %v232 = vld.sshfl [vmem:[#allocation1 + $0x8] sm:$0xff pattern:$0x73625140]
      %v234 = vld.sshfl [vmem:[#allocation1 + $0x10] sm:$0xff pattern:$0x73625140]
      %236 = vrot.lane.b32.xlu0 %v230, 109
      %v237 = vpop.permute.xlu0 %236
      %238 = vrot.lane.b32.xlu0 %v232, 109
      %v239 = vpop.permute.xlu0 %238
      %240 = vrot.lane.b32.xlu0 %v234, 109
      %v241 = vpop.permute.xlu0 %240
      %vm242 = vcmask 891904
      %v243 = vsel %vm242, %v237, %v239
      %v244 = vsel %vm242, %v239, %v241
      %s245 = scalar_lea.vmem [#allocation1], 1
      %246 = vst [vmem:[%s245] ss:$4 sm:$0xff] %v172
      %v247 = vld.sshfl [vmem:[#allocation1] sm:$0xff pattern:$0x73625140]
      %v249 = vld.sshfl [vmem:[#allocation1 + $0x8] sm:$0xff pattern:$0x73625140]
      %v251 = vld.sshfl [vmem:[#allocation1 + $0x10] sm:$0xff pattern:$0x73625140]
      %253 = vrot.lane.b32.xlu0 %v247, 108
      %v254 = vpop.permute.xlu0 %253
      %255 = vrot.lane.b32.xlu0 %v249, 108
      %v256 = vpop.permute.xlu0 %255
      %257 = vrot.lane.b32.xlu0 %v251, 108
      %v258 = vpop.permute.xlu0 %257
      %vm259 = vcmask 883712
      %v260 = vsel %vm259, %v254, %v256
      %v261 = vsel %vm259, %v256, %v258
      %s262 = scalar_lea.vmem [#allocation1], 2
      %263 = vst [vmem:[%s262] ss:$4 sm:$0xff] %v172
      %v264 = vld.sshfl [vmem:[#allocation1] sm:$0xff pattern:$0x73625140]
      %v266 = vld.sshfl [vmem:[#allocation1 + $0x8] sm:$0xff pattern:$0x73625140]
      %v268 = vld.sshfl [vmem:[#allocation1 + $0x10] sm:$0xff pattern:$0x73625140]
      %270 = vrot.lane.b32.xlu0 %v264, 92
      %v271 = vpop.permute.xlu0 %270
      %272 = vrot.lane.b32.xlu0 %v266, 92
      %v273 = vpop.permute.xlu0 %272
      %274 = vrot.lane.b32.xlu0 %v268, 92
      %v275 = vpop.permute.xlu0 %274
      %vm276 = vcmask 752640
      %v277 = vsel %vm276, %v271, %v273
      %v278 = vsel %vm276, %v273, %v275
      %s279 = scalar_lea.vmem [#allocation1], 3
      %280 = vst [vmem:[%s279] ss:$4 sm:$0xff] %v172
      %v281 = vld.sshfl [vmem:[#allocation1] sm:$0xff pattern:$0x73625140]
      %v283 = vld.sshfl [vmem:[#allocation1 + $0x8] sm:$0xff pattern:$0x73625140]
      %v285 = vld.sshfl [vmem:[#allocation1 + $0x10] sm:$0xff pattern:$0x73625140]
      %287 = vrot.lane.b32.xlu0 %v281, 91
      %v288 = vpop.permute.xlu0 %287
      %289 = vrot.lane.b32.xlu0 %v283, 91
      %v290 = vpop.permute.xlu0 %289
      %291 = vrot.lane.b32.xlu0 %v285, 91
      %v292 = vpop.permute.xlu0 %291
      %vm293 = vcmask 744448
      %v294 = vsel %vm293, %v288, %v290
      %v295 = vsel %vm293, %v290, %v292
      %296 = vst [vmem:[#allocation1] ss:$4 sm:$0xff] %v172
      %v297 = vld.sshfl [vmem:[#allocation1] sm:$0xff pattern:$0x73625140]
      %v299 = vld.sshfl [vmem:[#allocation1 + $0x8] sm:$0xff pattern:$0x73625140]
      %v301 = vld.sshfl [vmem:[#allocation1 + $0x10] sm:$0xff pattern:$0x73625140]
      %303 = vrot.lane.b32.xlu0 %v297, 90
      %v304 = vpop.permute.xlu0 %303
      %305 = vrot.lane.b32.xlu0 %v299, 90
      %v306 = vpop.permute.xlu0 %305
      %307 = vrot.lane.b32.xlu0 %v301, 90
      %v308 = vpop.permute.xlu0 %307
      %vm309 = vcmask 736256
      %v310 = vsel %vm309, %v304, %v306
      %v311 = vsel %vm309, %v306, %v308
      %vm312 = vcmask 1041408
      %v314 = vsel %vm312, %v175, %v193
      %v316 = vsel %vm312, %v176, %v194
      %v318 = vsel %vm312, %v177, %v191
      %vm319 = vcmask 1043456
      %v321 = vsel %vm319, %v314, %v210
      %v323 = vsel %vm319, %v316, %v211
      %v325 = vsel %vm319, %v318, %v208
      %vm326 = vcmask 1045504
      %v328 = vsel %vm326, %v321, %v227
      %v331 = vsel %vm326, %v323, %v228
      %v334 = vsel %vm326, %v325, %v225
      %v338 = vsel %vm312, %v243, %v260
      %v341 = vsel %vm312, %v244, %v261
      %v344 = vsel %vm312, %v241, %v258
      %v346 = vsel %vm319, %v338, %v277
      %v348 = vsel %vm319, %v341, %v278
      %v350 = vsel %vm319, %v344, %v275
      %v352 = vsel %vm326, %v346, %v294
      %v355 = vsel %vm326, %v348, %v295
      %v358 = vsel %vm326, %v350, %v292
      %v360 = vld [vmem:[%s1] sm:$0xf]
      %v361 = vld [vmem:[%s2] sm:$0xff]
      %363 = vset.pattern.permute.xlu0 0
      %364 = vperm.xlu0 %363, %v361
      %v365 = vpop.permute.xlu0 %364
      %vm367 = vcmask 293888
      %v369 = vsel %vm367, %v360, 0
      %v372 = vsel %vm312, %v310, 0
      %v375 = vsel %vm312, %v311, 0
      %v378 = vsel %vm312, %v308, 0
      %380 = vmatpush.bf16.msra.mxu0 0
      %381 = vmatpush.bf16.msra.mxu0 0
      %382 = vmatpush.bf16.msra.mxu0 0
      %383 = vmatpush.bf16.msra.mxu0 0
      %384 = vmatpush.bf16.msra.mxu0 0
      %385 = vmatpush.bf16.msra.mxu0 %v372
      %386 = vmatpush.bf16.msra.mxu0 %v352
      %387 = vmatpush.bf16.msra.mxu0 %v328
      %388 = vmatmul.bf16.gmra.mxu0 %v369
      %v389 = vpop.f32.mrf.mxu0
      %v390 = vadd.f32 %v365, %v389
      %v391 = vpop.f32.mrf.mxu0
      %392 = vdwg.mxu0
      %393 = vmatpush.bf16.msra.mxu0 0
      %394 = vmatpush.bf16.msra.mxu0 0
      %395 = vmatpush.bf16.msra.mxu0 0
      %396 = vmatpush.bf16.msra.mxu0 0
      %397 = vmatpush.bf16.msra.mxu0 0
      %398 = vmatpush.bf16.msra.mxu0 %v375
      %399 = vmatpush.bf16.msra.mxu0 %v355
      %400 = vmatpush.bf16.msra.mxu0 %v331
      %401 = vmatmul.bf16.gmra.mxu0 %v369
      %v402 = vpop.f32.mrf.mxu0
      %v403 = vadd.f32 %v365, %v402
      %v404 = vpop.f32.mrf.mxu0
      %405 = vdwg.mxu0
      %406 = vmatpush.bf16.msra.mxu0 0
      %407 = vmatpush.bf16.msra.mxu0 0
      %408 = vmatpush.bf16.msra.mxu0 0
      %409 = vmatpush.bf16.msra.mxu0 0
      %410 = vmatpush.bf16.msra.mxu0 0
      %411 = vmatpush.bf16.msra.mxu0 %v378
      %412 = vmatpush.bf16.msra.mxu0 %v358
      %413 = vmatpush.bf16.msra.mxu0 %v334
      %414 = vmatmul.bf16.gmra.mxu0 %v369
      %v415 = vpop.f32.mrf.mxu0
      %v416 = vadd.f32 %v365, %v415
      %v417 = vpop.f32.mrf.mxu0
      %418 = vdwg.mxu0
      %v419 = vmax.f32 %v390, 0.0
      %v420 = vmax.f32 %v403, 0.0
      %v421 = vmax.f32 %v416, 0.0
      %422 = vst [vmem:[%s170] sm:$0xff] %v419
      %423 = vst [vmem:[%s170 + $0x8] sm:$0xff] %v420
      %vm424 = vcmask 261120
      %425 = vst.msk [vmem:[%s170 + $0x10] sm:$0xff] %vm424, %v421
      %p426 = scmp.lt.s32.totalorder %s14, 1
      %s427 = scalar_select %p426, %s14, 1
      %s428 = smul.addr %s427, 3
      %s429 = smul.addr %s428, 8
      %s430 = scalar_lea.vmem %s3, %s429
      // Predicated region
      $region33: #{basic_conv2d_forward.1} parent=31 // pred_check
        %p431 = pneg %p100
      $region34: #{basic_conv2d_forward.1} parent=31 // pred_check_branch
        %433 = sbr.rel (%p431) target = $region36
      $region35: #{basic_conv2d_forward.1} parent=31 // pred_region
        _
      $region36: #{basic_conv2d_forward.1} parent=31 // pred_fallthru
        _
    $region32: #{basic_conv2d_forward.1} parent=5 // pred_fallthru
      _
    %p434 = scmp.le.s32.totalorder 2, %s9
    // Predicated region
    $region37: #{basic_conv2d_forward.1} parent=5 // pred_check
      %p435 = pneg %p434
    $region38: #{basic_conv2d_forward.1} parent=5 // pred_check_branch
      %437 = sbr.rel (%p435) target = $region40
    $region39: #{basic_conv2d_forward.1} parent=5 // pred_region
      %s438 = ssub.s32 %s9, 2
      // Predicated region
      $region41: #{basic_conv2d_forward.1} parent=39 // pred_check
        %p439 = pneg %p106
      $region42: #{basic_conv2d_forward.1} parent=39 // pred_check_branch
        %441 = sbr.rel (%p439) target = $region44
      $region43: #{basic_conv2d_forward.1} parent=39 // pred_region
        %p442 = scmp.lt.s32.totalorder %s15, 1
        %s443 = scalar_select %p442, %s15, 1
        %s444 = smul.addr %s443, 3
        %s445 = smul.addr %s444, 8
        %s446 = scalar_lea.vmem %s3, %s445
      $region44: #{basic_conv2d_forward.1} parent=39 // pred_fallthru
        _
    $region40: #{basic_conv2d_forward.1} parent=5 // pred_fallthru
      _
  $region6: #{basic_conv2d_forward.1} parent=0 // loop_footer
    %s13 = sadd.s32 1, %s9
  $region7: #{basic_conv2d_forward.1} parent=0 // loop_footer_branch
    %8 = sbr.rel target = $region3
  $region8: #{basic_conv2d_forward.1} parent=0 // loop_exit
    _

</llo_original>
